<compile_context>
chip_gen: v7x
topology: tpu7x:2x2x1
jax: 0.10.0
libtpu: 0.0.40
codegen_flags: <defaults>
</compile_context>

<pallas_src>
import functools

import jax
import jax.numpy as jnp
from jax.experimental import pallas as pl
from jax.experimental.pallas import tpu as pltpu


# ------------- fused kernel: conv (single im2col GEMM) + ReLU + GAP + folded head -------------

def fused_forward_kernel(p_ref, w36_ref, cb_ref, wh_ref, bh_ref, feat_ref, logit_ref):
    """One batch-block per grid step.

    p_ref    : (Bblk, HW, K)  bf16 im2col patches, K = 9*Cin (tap order kh, kw, ci)
    w36_ref  : (K, Cout)      bf16 conv weight
    cb_ref   : (1, Cout)      f32 conv bias
    wh_ref   : (Cout, C)      bf16 folded reprojector+head weight
    bh_ref   : (1, C)         f32 folded reprojector+head bias
    feat_ref : (Bblk, Cout)   f32 pre-reprojection features (GAP output)
    logit_ref: (Bblk, C)      f32 logits
    """
    bblk, hw, k = p_ref.shape

    # Single conv GEMM for the whole block: (Bblk*HW, K) x (K, Cout), f32 accumulation.
    patches = p_ref[...].reshape(bblk * hw, k)                      # layout-free merge
    acc = jnp.dot(patches, w36_ref[...], preferred_element_type=jnp.float32)
    acc = jnp.maximum(acc + cb_ref[...], 0.0)                       # bias + ReLU, f32 VPU

    # Global average pool per image: static, sublane-aligned row slices (HW = 256).
    rows = []
    for b in range(bblk):                                           # static unroll (Bblk small)
        rows.append(jnp.mean(acc[b * hw:(b + 1) * hw, :], axis=0, keepdims=True))
    feat = rows[0] if bblk == 1 else jnp.concatenate(rows, axis=0)  # (Bblk, Cout) f32
    feat_ref[...] = feat.astype(feat_ref.dtype)

    # Folded reprojector + head: one tiny matmul with M = Bblk (not M = 1 per image).
    wh = wh_ref[...].astype(jnp.float32)
    logits = jnp.dot(feat, wh, preferred_element_type=jnp.float32) + bh_ref[...]
    logit_ref[...] = logits.astype(logit_ref.dtype)


def conv_gap_head(patches, conv_w36, conv_b, head_w, head_b):
    B, HW, K = patches.shape
    Cout = conv_w36.shape[-1]
    C = head_w.shape[-1]
    # Whole batch in one grid step when small (per-step overhead ~0.35 us would dominate);
    # only split into 2 blocks when each block has real work, so v7x's second TensorCore
    # actually helps (no-op on single-TC v5e/v6e).
    n_blocks = 2 if (B >= 32 and B % 2 == 0) else 1
    bblk = B // n_blocks
    return pl.pallas_call(
        fused_forward_kernel,
        out_shape=(jax.ShapeDtypeStruct((B, Cout), jnp.float32),
                   jax.ShapeDtypeStruct((B, C), jnp.float32)),
        grid_spec=pltpu.PrefetchScalarGridSpec(
            num_scalar_prefetch=0,
            grid=(n_blocks,),
            in_specs=[
                pl.BlockSpec((bblk, HW, K), lambda g: (g, 0, 0)),
                pl.BlockSpec((K, Cout), lambda g: (0, 0)),
                pl.BlockSpec((1, Cout), lambda g: (0, 0)),
                pl.BlockSpec((Cout, C), lambda g: (0, 0)),
                pl.BlockSpec((1, C), lambda g: (0, 0)),
            ],
            out_specs=(
                pl.BlockSpec((bblk, Cout), lambda g: (g, 0)),
                pl.BlockSpec((bblk, C), lambda g: (g, 0)),
            ),
        ),
        compiler_params=pltpu.CompilerParams(dimension_semantics=("parallel",)),
    )(patches, conv_w36, conv_b, head_w, head_b)


# ------------------------------------- wrapper glue -------------------------------------------

def im2col_3x3_same(x_nchw, dtype=jnp.bfloat16):
    """(B, Cin, H, W) NCHW image -> (B, H*W, 9*Cin) bf16 patch matrix.

    Same padding; pad + 9 taps + relayout + bf16 cast fuse into one XLA copy fusion.
    K order is (kh, kw, ci), matching conv_w.reshape(9*Cin, Cout).
    """
    B, Cin, H, W = x_nchw.shape
    xp = jnp.pad(x_nchw, ((0, 0), (0, 0), (1, 1), (1, 1)))
    taps = [xp[:, :, kh:kh + H, kw:kw + W] for kh in range(3) for kw in range(3)]
    p = jnp.stack(taps, axis=1)                   # (B, 9, Cin, H, W)
    p = p.reshape(B, 9 * Cin, H * W)
    return jnp.transpose(p, (0, 2, 1)).astype(dtype)   # (B, H*W, 9*Cin)


def init_params(key, *, cin=4, feature_dim=32, init_cls=8):
    ks = jax.random.split(key, 7)
    s = 0.05
    return {
        "conv_w": s * jax.random.normal(ks[0], (3, 3, cin, feature_dim), jnp.float32),
        "conv_b": s * jax.random.normal(ks[1], (1, feature_dim), jnp.float32),
        "reproj_w": s * jax.random.normal(ks[2], (feature_dim, feature_dim), jnp.float32),
        "reproj_b": s * jax.random.normal(ks[3], (1, feature_dim), jnp.float32),
        "reproj_gamma": 1.0 + s * jax.random.normal(ks[4], (1, feature_dim), jnp.float32),
        "reproj_beta": jnp.zeros((1, feature_dim), jnp.float32),
        "head_w": s * jax.random.normal(ks[5], (feature_dim, init_cls), jnp.float32),
        "head_b": s * jax.random.normal(ks[6], (1, init_cls), jnp.float32),
    }


def fold_inference_params(params):
    """One-time (inference) weight folding + bf16 cast of the matmul operands.

    reprojector: y = (f @ Wr + br) * gamma + beta = f @ (Wr*gamma) + (br*gamma + beta)
    head:        logits = y @ Wh + bh
    => logits = f @ [(Wr*gamma) @ Wh] + [(br*gamma + beta) @ Wh + bh]
    Forward-pass equivalent; inference-only (changes gradient structure).
    NOTE: conv_w is (kh, kw, ci, co).  PyTorch OIHW weights must be transposed to this
    layout first, or the K-order will not match the im2col tap order.
    """
    kh, kw, cin, cout = params["conv_w"].shape
    conv_w36 = params["conv_w"].reshape(kh * kw * cin, cout)        # K-order (kh, kw, ci)
    wr_eff = params["reproj_w"] * params["reproj_gamma"]            # (D, D)
    br_eff = params["reproj_b"] * params["reproj_gamma"] + params["reproj_beta"]
    head_w = wr_eff @ params["head_w"]                              # (D, C)
    head_b = br_eff @ params["head_w"] + params["head_b"]           # (1, C)
    return {
        "conv_w36": conv_w36.astype(jnp.bfloat16),
        "conv_b": params["conv_b"].astype(jnp.float32),
        "head_w": head_w.astype(jnp.bfloat16),
        "head_b": head_b.astype(jnp.float32),
    }


@functools.partial(jax.jit, static_argnames=("x_type",))
def mainnet_forward(folded, x, x_type="image"):
    """Mirrors MainNet.forward: returns PRE-reprojection features and logits."""
    # TODO(synk): get_convnet / Reprojector / FcHead internals are not in the reference
    # source; assumed backbone = 3x3 same conv + ReLU + GAP, reprojector = linear + affine,
    # head = linear (same assumption as the previous checked version).
    if x_type != "feature":
        patches = im2col_3x3_same(x)
        features, logits = conv_gap_head(
            patches, folded["conv_w36"], folded["conv_b"],
            folded["head_w"], folded["head_b"])
    else:
        # Tiny (B, D) x (D, C) matmul: plain XLA dot, far below custom-call launch cost.
        features = x
        logits = jnp.dot(features, folded["head_w"].astype(jnp.float32)) + folded["head_b"]
    return {"features": features, "logits": logits}


if __name__ == "__main__":
    key = jax.random.PRNGKey(0)
    k_param, k_x = jax.random.split(key)

    B, Cin, H, W = 2, 4, 16, 16
    feature_dim, init_cls = 32, 8

    params = init_params(k_param, cin=Cin, feature_dim=feature_dim, init_cls=init_cls)
    folded = fold_inference_params(params)   # one-time inference weight folding
    x = jax.random.normal(k_x, (B, Cin, H, W), jnp.float32)   # NCHW, as in PyTorch

    out = mainnet_forward(folded, x, x_type="image")
    jax.block_until_ready(out)
    assert out["features"].shape == (B, feature_dim)
    assert out["logits"].shape == (B, init_cls)
    assert out["features"].dtype == jnp.float32 and out["logits"].dtype == jnp.float32

    # also exercise the x_type='feature' path
    out2 = mainnet_forward(folded, out["features"], x_type="feature")
    jax.block_until_ready(out2)
    assert out2["logits"].shape == (B, init_cls)

    print("KERNEL_OK")
</pallas_src>

<mosaic_0001>
module attributes {stable_mosaic.version = 11 : i64} {
  func.func @fused_forward_kernel(%arg0: i32, %arg1: memref<2x256x36xbf16, #tpu.memory_space<vmem>>, %arg2: memref<36x32xbf16, #tpu.memory_space<vmem>>, %arg3: memref<1x32xf32, #tpu.memory_space<vmem>>, %arg4: memref<32x8xbf16, #tpu.memory_space<vmem>>, %arg5: memref<1x8xf32, #tpu.memory_space<vmem>>, %arg6: memref<2x32xf32, #tpu.memory_space<vmem>>, %arg7: memref<2x8xf32, #tpu.memory_space<vmem>>) attributes {dimension_semantics = [#tpu.dimension_semantics<parallel>], iteration_bounds = array<i64: 1>, scalar_prefetch = 0 : i64, scratch_operands = 0 : i64, tpu.core_type = #tpu.core_type<tc>, window_params = [{transform_indices = @transform_0, window_bounds = array<i64: 2, 256, 36>}, {pipeline_mode = #tpu.pipeline_mode<synchronous>, transform_indices = @transform_1, window_bounds = array<i64: 36, 32>}, {pipeline_mode = #tpu.pipeline_mode<synchronous>, transform_indices = @transform_2, window_bounds = array<i64: 1, 32>}, {pipeline_mode = #tpu.pipeline_mode<synchronous>, transform_indices = @transform_3, window_bounds = array<i64: 32, 8>}, {pipeline_mode = #tpu.pipeline_mode<synchronous>, transform_indices = @transform_4, window_bounds = array<i64: 1, 8>}, {transform_indices = @transform_5, window_bounds = array<i64: 2, 32>}, {transform_indices = @transform_6, window_bounds = array<i64: 2, 8>}]} {
    %c0 = arith.constant 0 : index
    %c0_0 = arith.constant 0 : index
    %c0_1 = arith.constant 0 : index
    %0 = vector.load %arg1[%c0, %c0_0, %c0_1] : memref<2x256x36xbf16, #tpu.memory_space<vmem>>, vector<2x256x36xbf16>
    %1 = vector.shape_cast %0 : vector<2x256x36xbf16> to vector<512x36xbf16>
    %c0_2 = arith.constant 0 : index
    %c0_3 = arith.constant 0 : index
    %2 = vector.load %arg2[%c0_2, %c0_3] : memref<36x32xbf16, #tpu.memory_space<vmem>>, vector<36x32xbf16>
    %cst = arith.constant dense<0.000000e+00> : vector<512x32xf32>
    %3 = tpu.matmul %1, %2, %cst {dimension_numbers = #tpu.dot_dimension_numbers<[1], [0], [0], [1], [0, 0, 1, 1], [], []>} : vector<512x36xbf16>, vector<36x32xbf16>, vector<512x32xf32> -> vector<512x32xf32>
    %c0_4 = arith.constant 0 : index
    %c0_5 = arith.constant 0 : index
    %4 = vector.load %arg3[%c0_4, %c0_5] : memref<1x32xf32, #tpu.memory_space<vmem>>, vector<1x32xf32>
    %5 = vector.broadcast %4 : vector<1x32xf32> to vector<512x32xf32>
    %6 = arith.addf %3, %5 : vector<512x32xf32>
    %cst_6 = arith.constant 0.000000e+00 : f32
    %7 = vector.broadcast %cst_6 : f32 to vector<512x32xf32>
    %8 = arith.maximumf %6, %7 : vector<512x32xf32>
    %9 = vector.extract_strided_slice %8 {offsets = [0, 0], sizes = [256, 32], strides = [1, 1]} : vector<512x32xf32> to vector<256x32xf32>
    %cst_7 = arith.constant dense<0.000000e+00> : vector<32xf32>
    %10 = vector.multi_reduction <add>, %9, %cst_7 [0] : vector<256x32xf32> to vector<32xf32>
    %11 = vector.shape_cast %10 : vector<32xf32> to vector<1x32xf32>
    %cst_8 = arith.constant 2.560000e+02 : f32
    %12 = vector.broadcast %cst_8 : f32 to vector<1x32xf32>
    %13 = arith.divf %11, %12 : vector<1x32xf32>
    %14 = vector.extract_strided_slice %8 {offsets = [256, 0], sizes = [256, 32], strides = [1, 1]} : vector<512x32xf32> to vector<256x32xf32>
    %cst_9 = arith.constant dense<0.000000e+00> : vector<32xf32>
    %15 = vector.multi_reduction <add>, %14, %cst_9 [0] : vector<256x32xf32> to vector<32xf32>
    %16 = vector.shape_cast %15 : vector<32xf32> to vector<1x32xf32>
    %cst_10 = arith.constant 2.560000e+02 : f32
    %17 = vector.broadcast %cst_10 : f32 to vector<1x32xf32>
    %18 = arith.divf %16, %17 : vector<1x32xf32>
    %19 = tpu.concatenate %13, %18 in 0 : vector<1x32xf32>, vector<1x32xf32> -> vector<2x32xf32>
    %c0_11 = arith.constant 0 : index
    %c0_12 = arith.constant 0 : index
    %20 = vector.load %arg6[%c0_11, %c0_12] : memref<2x32xf32, #tpu.memory_space<vmem>>, vector<2x32xf32>
    tpu.vector_store %arg6[%c0_11, %c0_12], %19 {strides = array<i32>} : memref<2x32xf32, #tpu.memory_space<vmem>>, vector<2x32xf32>,
    %c0_13 = arith.constant 0 : index
    %c0_14 = arith.constant 0 : index
    %21 = vector.load %arg4[%c0_13, %c0_14] : memref<32x8xbf16, #tpu.memory_space<vmem>>, vector<32x8xbf16>
    %22 = arith.extf %21 : vector<32x8xbf16> to vector<32x8xf32>
    %cst_15 = arith.constant dense<0.000000e+00> : vector<2x8xf32>
    %23 = tpu.matmul %19, %22, %cst_15 {dimension_numbers = #tpu.dot_dimension_numbers<[1], [0], [0], [1], [0, 0, 1, 1], [], []>} : vector<2x32xf32>, vector<32x8xf32>, vector<2x8xf32> -> vector<2x8xf32>
    %c0_16 = arith.constant 0 : index
    %c0_17 = arith.constant 0 : index
    %24 = vector.load %arg5[%c0_16, %c0_17] : memref<1x8xf32, #tpu.memory_space<vmem>>, vector<1x8xf32>
    %25 = vector.broadcast %24 : vector<1x8xf32> to vector<2x8xf32>
    %26 = arith.addf %23, %25 : vector<2x8xf32>
    %c0_18 = arith.constant 0 : index
    %c0_19 = arith.constant 0 : index
    %27 = vector.load %arg7[%c0_18, %c0_19] : memref<2x8xf32, #tpu.memory_space<vmem>>, vector<2x8xf32>
    tpu.vector_store %arg7[%c0_18, %c0_19], %26 {strides = array<i32>} : memref<2x8xf32, #tpu.memory_space<vmem>>, vector<2x8xf32>,
    return
  }
  func.func @transform_0(%arg0: i32) -> (i32, i32, i32) {
    %c0_i32 = arith.constant 0 : i32
    %c0_i32_0 = arith.constant 0 : i32
    %c0_i32_1 = arith.constant 0 : i32
    return %arg0, %c0_i32, %c0_i32_0 : i32, i32, i32
  }
  func.func @transform_1(%arg0: i32) -> (i32, i32) {
    %c0_i32 = arith.constant 0 : i32
    %c0_i32_0 = arith.constant 0 : i32
    %c0_i32_1 = arith.constant 0 : i32
    return %c0_i32, %c0_i32_0 : i32, i32
  }
  func.func @transform_2(%arg0: i32) -> (i32, i32) {
    %c0_i32 = arith.constant 0 : i32
    %c0_i32_0 = arith.constant 0 : i32
    %c0_i32_1 = arith.constant 0 : i32
    return %c0_i32, %c0_i32_0 : i32, i32
  }
  func.func @transform_3(%arg0: i32) -> (i32, i32) {
    %c0_i32 = arith.constant 0 : i32
    %c0_i32_0 = arith.constant 0 : i32
    %c0_i32_1 = arith.constant 0 : i32
    return %c0_i32, %c0_i32_0 : i32, i32
  }
  func.func @transform_4(%arg0: i32) -> (i32, i32) {
    %c0_i32 = arith.constant 0 : i32
    %c0_i32_0 = arith.constant 0 : i32
    %c0_i32_1 = arith.constant 0 : i32
    return %c0_i32, %c0_i32_0 : i32, i32
  }
  func.func @transform_5(%arg0: i32) -> (i32, i32) {
    %c0_i32 = arith.constant 0 : i32
    %c0_i32_0 = arith.constant 0 : i32
    return %arg0, %c0_i32 : i32, i32
  }
  func.func @transform_6(%arg0: i32) -> (i32, i32) {
    %c0_i32 = arith.constant 0 : i32
    %c0_i32_0 = arith.constant 0 : i32
    return %arg0, %c0_i32 : i32, i32
  }
}

</mosaic_0001>

<llo_original>
// kernel: mainnet_forward.1
$region0: #{mainnet_forward.1}
  #allocation0 [shape = 'u32[]', space=smem, size = 0x4, offset = 0x4, fixed_abs, tag = 'smem constant byte address 0x4 - core index']
  #allocation1 [shape = 'u32[144,128]{1,0:T(1,128)}', space=vmem, size = 0x12000, scoped, tag = 'internal scratch']
  %s0 = inlined_call_operand.vmem [shape: bf16[2,256,36], index: 0, kind: input, shape index: {}]
  %s1 = inlined_call_operand.vmem [shape: bf16[36,32], index: 1, kind: input, shape index: {}]
  %s2 = inlined_call_operand.vmem [shape: f32[1,32], index: 2, kind: input, shape index: {}]
  %s3 = inlined_call_operand.vmem [shape: bf16[32,8], index: 3, kind: input, shape index: {}]
  %s4 = inlined_call_operand.vmem [shape: f32[1,8], index: 4, kind: input, shape index: {}]
  %s5 = inlined_call_operand.hbm [shape: f32[2,32], index: 5, kind: output, shape index: {0}]
  %s6 = inlined_call_operand.hbm [shape: f32[2,8], index: 6, kind: output, shape index: {1}]
  %7 = xla_tuple %s5, %s6
  %s8 = sld [smem:[#allocation0]]
  $region38: #{mainnet_forward.1} parent=0
    _
  %s10 = ssub.s32 1, %s8
  %s11 = scalar_select 0, %s10, %s8
  $region1: #{mainnet_forward.1} parent=0
    #allocation2 [shape = 'u8[1024]{0}', space=vmem, size = 0x400, scoped, tag = 'output window, operand 0, single buffered']
    #allocation3 [shape = 's32[1]{0}', space=sflag, size = 0x4, scoped, tag = 'scoped memory for mainnet_forward.1']
    #allocation4 [shape = 'u8[1024]{0}', space=vmem, size = 0x400, scoped, tag = 'output window, operand 1, single buffered']
    #allocation5 [shape = 's32[1]{0}', space=sflag, size = 0x4, scoped, tag = 'scoped memory for mainnet_forward.1']
    %12 = vsyncpa [#allocation3], 0
    %13 = vsyncpa [#allocation5], 0
    // Predicated region
    $region2: #{mainnet_forward.1} parent=1 // pred_check
      _
    $region3: #{mainnet_forward.1} parent=1 // pred_check_branch
      %15 = sbr.rel (0) target = $region5
    $region4: #{mainnet_forward.1} parent=1 // pred_region
      _
    $region5: #{mainnet_forward.1} parent=1 // pred_fallthru
      _
    // Predicated region
    $region6: #{mainnet_forward.1} parent=1 // pred_check
      _
    $region7: #{mainnet_forward.1} parent=1 // pred_check_branch
      %17 = sbr.rel (0) target = $region9
    $region8: #{mainnet_forward.1} parent=1 // pred_region
      _
    $region9: #{mainnet_forward.1} parent=1 // pred_fallthru
      _
    // Predicated region
    $region10: #{mainnet_forward.1} parent=1 // pred_check
      _
    $region11: #{mainnet_forward.1} parent=1 // pred_check_branch
      %19 = sbr.rel (0) target = $region13
    $region12: #{mainnet_forward.1} parent=1 // pred_region
      _
    $region13: #{mainnet_forward.1} parent=1 // pred_fallthru
      _
    // Predicated region
    $region14: #{mainnet_forward.1} parent=1 // pred_check
      _
    $region15: #{mainnet_forward.1} parent=1 // pred_check_branch
      %21 = sbr.rel (0) target = $region17
    $region16: #{mainnet_forward.1} parent=1 // pred_region
      _
    $region17: #{mainnet_forward.1} parent=1 // pred_fallthru
      _
    // Predicated region
    $region18: #{mainnet_forward.1} parent=1 // pred_check
      _
    $region19: #{mainnet_forward.1} parent=1 // pred_check_branch
      %23 = sbr.rel (0) target = $region21
    $region20: #{mainnet_forward.1} parent=1 // pred_region
      _
    $region21: #{mainnet_forward.1} parent=1 // pred_fallthru
      _
    %v25 = vld [vmem:[%s0] sm:$0xf]
    %v26 = vld [vmem:[%s0 + $0x4] sm:$0xf]
    %v27 = vld [vmem:[%s0 + $0x8] sm:$0xf]
    %v28 = vld [vmem:[%s0 + $0xc] sm:$0xf]
    %v29 = vld [vmem:[%s0 + $0x10] sm:$0xf]
    %v30 = vld [vmem:[%s0 + $0x14] sm:$0xf]
    %v31 = vld [vmem:[%s0 + $0x18] sm:$0xf]
    %v32 = vld [vmem:[%s0 + $0x1c] sm:$0xf]
    %v33 = vld [vmem:[%s0 + $0x20] sm:$0xf]
    %v34 = vld [vmem:[%s0 + $0x24] sm:$0xf]
    %v35 = vld [vmem:[%s0 + $0x28] sm:$0xf]
    %v36 = vld [vmem:[%s0 + $0x2c] sm:$0xf]
    %v37 = vld [vmem:[%s0 + $0x30] sm:$0xf]
    %v38 = vld [vmem:[%s0 + $0x34] sm:$0xf]
    %v39 = vld [vmem:[%s0 + $0x38] sm:$0xf]
    %v40 = vld [vmem:[%s0 + $0x3c] sm:$0xf]
    %v41 = vld [vmem:[%s0 + $0x40] sm:$0xf]
    %v42 = vld [vmem:[%s0 + $0x44] sm:$0xf]
    %v43 = vld [vmem:[%s0 + $0x48] sm:$0xf]
    %v44 = vld [vmem:[%s0 + $0x4c] sm:$0xf]
    %v45 = vld [vmem:[%s0 + $0x50] sm:$0xf]
    %v46 = vld [vmem:[%s0 + $0x54] sm:$0xf]
    %v47 = vld [vmem:[%s0 + $0x58] sm:$0xf]
    %v48 = vld [vmem:[%s0 + $0x5c] sm:$0xf]
    %v49 = vld [vmem:[%s0 + $0x60] sm:$0xf]
    %v50 = vld [vmem:[%s0 + $0x64] sm:$0xf]
    %v51 = vld [vmem:[%s0 + $0x68] sm:$0xf]
    %v52 = vld [vmem:[%s0 + $0x6c] sm:$0xf]
    %v53 = vld [vmem:[%s0 + $0x70] sm:$0xf]
    %v54 = vld [vmem:[%s0 + $0x74] sm:$0xf]
    %v55 = vld [vmem:[%s0 + $0x78] sm:$0xf]
    %v56 = vld [vmem:[%s0 + $0x7c] sm:$0xf]
    %v57 = vld [vmem:[%s0 + $0x80] sm:$0xf]
    %v58 = vld [vmem:[%s0 + $0x84] sm:$0xf]
    %v59 = vld [vmem:[%s0 + $0x88] sm:$0xf]
    %v60 = vld [vmem:[%s0 + $0x8c] sm:$0xf]
    %v61 = vld [vmem:[%s0 + $0x90] sm:$0xf]
    %v62 = vld [vmem:[%s0 + $0x94] sm:$0xf]
    %v63 = vld [vmem:[%s0 + $0x98] sm:$0xf]
    %v64 = vld [vmem:[%s0 + $0x9c] sm:$0xf]
    %v65 = vld [vmem:[%s0 + $0xa0] sm:$0xf]
    %v66 = vld [vmem:[%s0 + $0xa4] sm:$0xf]
    %v67 = vld [vmem:[%s0 + $0xa8] sm:$0xf]
    %v68 = vld [vmem:[%s0 + $0xac] sm:$0xf]
    %v69 = vld [vmem:[%s0 + $0xb0] sm:$0xf]
    %v70 = vld [vmem:[%s0 + $0xb4] sm:$0xf]
    %v71 = vld [vmem:[%s0 + $0xb8] sm:$0xf]
    %v72 = vld [vmem:[%s0 + $0xbc] sm:$0xf]
    %v73 = vld [vmem:[%s0 + $0xc0] sm:$0xf]
    %v74 = vld [vmem:[%s0 + $0xc4] sm:$0xf]
    %v75 = vld [vmem:[%s0 + $0xc8] sm:$0xf]
    %v76 = vld [vmem:[%s0 + $0xcc] sm:$0xf]
    %v77 = vld [vmem:[%s0 + $0xd0] sm:$0xf]
    %v78 = vld [vmem:[%s0 + $0xd4] sm:$0xf]
    %v79 = vld [vmem:[%s0 + $0xd8] sm:$0xf]
    %v80 = vld [vmem:[%s0 + $0xdc] sm:$0xf]
    %v81 = vld [vmem:[%s0 + $0xe0] sm:$0xf]
    %v82 = vld [vmem:[%s0 + $0xe4] sm:$0xf]
    %v83 = vld [vmem:[%s0 + $0xe8] sm:$0xf]
    %v84 = vld [vmem:[%s0 + $0xec] sm:$0xf]
    %v85 = vld [vmem:[%s0 + $0xf0] sm:$0xf]
    %v86 = vld [vmem:[%s0 + $0xf4] sm:$0xf]
    %v87 = vld [vmem:[%s0 + $0xf8] sm:$0xf]
    %v88 = vld [vmem:[%s0 + $0xfc] sm:$0xf]
    %v89 = vld [vmem:[%s1] sm:$0xf]
    %v90 = vld [vmem:[%s1 + $0x4] sm:$0xf]
    %v91 = vld [vmem:[%s1 + $0x8] sm:$0xf]
    %v92 = vld [vmem:[%s1 + $0xc] sm:$0xf]
    %v93 = vld [vmem:[%s1 + $0x10] sm:$0x3]
    %v94 = vld [vmem:[%s2] sm:$0x1]
    %v96 = vlaneseq
    %v97 = vshrl.u32 %v96, 7
    %v98 = vsub.s32 0, %v97
    %v99 = vrot.slane %v94, %v98
    %v165 = vunpack.c.l.b16 %v25
    %v166 = vunpack.c.l.b16 %v26
    %v167 = vunpack.c.l.b16 %v27
    %v168 = vunpack.c.l.b16 %v28
    %v169 = vunpack.c.l.b16 %v29
    %v170 = vunpack.c.l.b16 %v30
    %v171 = vunpack.c.l.b16 %v31
    %v172 = vunpack.c.l.b16 %v32
    %v173 = vunpack.c.l.b16 %v33
    %v174 = vunpack.c.l.b16 %v34
    %v175 = vunpack.c.l.b16 %v35
    %v176 = vunpack.c.l.b16 %v36
    %v177 = vunpack.c.l.b16 %v37
    %v178 = vunpack.c.l.b16 %v38
    %v179 = vunpack.c.l.b16 %v39
    %v180 = vunpack.c.l.b16 %v40
    %v181 = vunpack.c.l.b16 %v41
    %v182 = vunpack.c.l.b16 %v42
    %v183 = vunpack.c.l.b16 %v43
    %v184 = vunpack.c.l.b16 %v44
    %v185 = vunpack.c.l.b16 %v45
    %v186 = vunpack.c.l.b16 %v46
    %v187 = vunpack.c.l.b16 %v47
    %v188 = vunpack.c.l.b16 %v48
    %v189 = vunpack.c.l.b16 %v49
    %v190 = vunpack.c.l.b16 %v50
    %v191 = vunpack.c.l.b16 %v51
    %v192 = vunpack.c.l.b16 %v52
    %v193 = vunpack.c.l.b16 %v53
    %v194 = vunpack.c.l.b16 %v54
    %v195 = vunpack.c.l.b16 %v55
    %v196 = vunpack.c.l.b16 %v56
    %v197 = vunpack.c.l.b16 %v57
    %v198 = vunpack.c.l.b16 %v58
    %v199 = vunpack.c.l.b16 %v59
    %v200 = vunpack.c.l.b16 %v60
    %v201 = vunpack.c.l.b16 %v61
    %v202 = vunpack.c.l.b16 %v62
    %v203 = vunpack.c.l.b16 %v63
    %v204 = vunpack.c.l.b16 %v64
    %v205 = vunpack.c.l.b16 %v65
    %v206 = vunpack.c.l.b16 %v66
    %v207 = vunpack.c.l.b16 %v67
    %v208 = vunpack.c.l.b16 %v68
    %v209 = vunpack.c.l.b16 %v69
    %v210 = vunpack.c.l.b16 %v70
    %v211 = vunpack.c.l.b16 %v71
    %v212 = vunpack.c.l.b16 %v72
    %v213 = vunpack.c.l.b16 %v73
    %v214 = vunpack.c.l.b16 %v74
    %v215 = vunpack.c.l.b16 %v75
    %v216 = vunpack.c.l.b16 %v76
    %v217 = vunpack.c.l.b16 %v77
    %v218 = vunpack.c.l.b16 %v78
    %v219 = vunpack.c.l.b16 %v79
    %v220 = vunpack.c.l.b16 %v80
    %v221 = vunpack.c.l.b16 %v81
    %v222 = vunpack.c.l.b16 %v82
    %v223 = vunpack.c.l.b16 %v83
    %v224 = vunpack.c.l.b16 %v84
    %v225 = vunpack.c.l.b16 %v85
    %v226 = vunpack.c.l.b16 %v86
    %v227 = vunpack.c.l.b16 %v87
    %v228 = vunpack.c.l.b16 %v88
    %v229 = vpack.c.b16 %v166, %v165
    %v230 = vpack.c.b16 %v168, %v167
    %v231 = vpack.c.b16 %v170, %v169
    %v232 = vpack.c.b16 %v172, %v171
    %v233 = vpack.c.b16 %v174, %v173
    %v234 = vpack.c.b16 %v176, %v175
    %v235 = vpack.c.b16 %v178, %v177
    %v236 = vpack.c.b16 %v180, %v179
    %v237 = vpack.c.b16 %v182, %v181
    %v238 = vpack.c.b16 %v184, %v183
    %v239 = vpack.c.b16 %v186, %v185
    %v240 = vpack.c.b16 %v188, %v187
    %v241 = vpack.c.b16 %v190, %v189
    %v242 = vpack.c.b16 %v192, %v191
    %v243 = vpack.c.b16 %v194, %v193
    %v244 = vpack.c.b16 %v196, %v195
    %v245 = vpack.c.b16 %v198, %v197
    %v246 = vpack.c.b16 %v200, %v199
    %v247 = vpack.c.b16 %v202, %v201
    %v248 = vpack.c.b16 %v204, %v203
    %v249 = vpack.c.b16 %v206, %v205
    %v250 = vpack.c.b16 %v208, %v207
    %v251 = vpack.c.b16 %v210, %v209
    %v252 = vpack.c.b16 %v212, %v211
    %v253 = vpack.c.b16 %v214, %v213
    %v254 = vpack.c.b16 %v216, %v215
    %v255 = vpack.c.b16 %v218, %v217
    %v256 = vpack.c.b16 %v220, %v219
    %v257 = vpack.c.b16 %v222, %v221
    %v258 = vpack.c.b16 %v224, %v223
    %v259 = vpack.c.b16 %v226, %v225
    %v260 = vpack.c.b16 %v228, %v227
    %v266 = vunpack.c.l.b16 %v89
    %v267 = vunpack.c.l.b16 %v90
    %v268 = vunpack.c.l.b16 %v91
    %v269 = vunpack.c.l.b16 %v92
    %v270 = vunpack.c.l.b16 %v93
    %v271 = vpack.c.b16 %v267, %v266
    %v272 = vpack.c.b16 %v269, %v268
    %v273 = vpack.c.b16 %v270, %v270
    %vm276 = vcmask 293888
    %v278 = vsel %vm276, %v229, 0
    %v281 = vsel %vm276, %v230, 0
    %v284 = vsel %vm276, %v231, 0
    %v287 = vsel %vm276, %v232, 0
    %v290 = vsel %vm276, %v233, 0
    %v293 = vsel %vm276, %v234, 0
    %v296 = vsel %vm276, %v235, 0
    %v299 = vsel %vm276, %v236, 0
    %v302 = vsel %vm276, %v237, 0
    %v305 = vsel %vm276, %v238, 0
    %v308 = vsel %vm276, %v239, 0
    %v311 = vsel %vm276, %v240, 0
    %v314 = vsel %vm276, %v241, 0
    %v317 = vsel %vm276, %v242, 0
    %v320 = vsel %vm276, %v243, 0
    %v323 = vsel %vm276, %v244, 0
    %v326 = vsel %vm276, %v245, 0
    %v329 = vsel %vm276, %v246, 0
    %v332 = vsel %vm276, %v247, 0
    %v335 = vsel %vm276, %v248, 0
    %v338 = vsel %vm276, %v249, 0
    %v341 = vsel %vm276, %v250, 0
    %v344 = vsel %vm276, %v251, 0
    %v347 = vsel %vm276, %v252, 0
    %v350 = vsel %vm276, %v253, 0
    %v353 = vsel %vm276, %v254, 0
    %v356 = vsel %vm276, %v255, 0
    %v359 = vsel %vm276, %v256, 0
    %v362 = vsel %vm276, %v257, 0
    %v365 = vsel %vm276, %v258, 0
    %v368 = vsel %vm276, %v259, 0
    %v371 = vsel %vm276, %v260, 0
    %vm373 = vcmask 1041408
    %v375 = vsel %vm373, %v273, 0
    %377 = vmatprep.subr.bf16.mxu0 0
    %378 = vmatpush1.bf16.msra.mxu0 %v271
    %379 = vmatprep.subr.bf16.mxu0 0
    %380 = vmatpush1.bf16.msra.mxu0 %v272
    %381 = vmatprep.subr.bf16.mxu0 0
    %382 = vmatpush1.bf16.msra.mxu0 %v375
    %383 = vmatprep.subr.bf16.mxu0 0
    %384 = vmatpush1.bf16.msra.mxu0 0
    %385 = vmatprep.subr.bf16.mxu0 0
    %386 = vmatpush1.bf16.msra.mxu0 0
    %387 = vmatprep.subr.bf16.mxu0 0
    %388 = vmatpush1.bf16.msra.mxu0 0
    %389 = vmatprep.subr.bf16.mxu0 0
    %390 = vmatpush1.bf16.msra.mxu0 0
    %391 = vmatprep.subr.bf16.mxu0 0
    %392 = vmatpush1.bf16.msra.mxu0 0
    %393 = vmatprep.subr.bf16.mxu0 0
    %394 = vmatpush1.bf16.msra.mxu0 0
    %395 = vmatprep.subr.bf16.mxu0 0
    %396 = vmatpush1.bf16.msra.mxu0 0
    %397 = vmatprep.subr.bf16.mxu0 0
    %398 = vmatpush1.bf16.msra.mxu0 0
    %399 = vmatprep.subr.bf16.mxu0 0
    %400 = vmatpush1.bf16.msra.mxu0 0
    %401 = vmatprep.subr.bf16.mxu0 0
    %402 = vmatpush1.bf16.msra.mxu0 0
    %403 = vmatprep.subr.bf16.mxu0 0
    %404 = vmatpush1.bf16.msra.mxu0 0
    %405 = vmatprep.subr.bf16.mxu0 0
    %406 = vmatpush1.bf16.msra.mxu0 0
    %407 = vmatprep.subr.bf16.mxu0 0
    %408 = vmatpush1.bf16.msra.mxu0 0
    %409 = vmatprep.mubr.bf16.mxu0 0
    %410 = vmatmul.mubr.bf16.gmra.mrb[0].mxu0 %v278
    %v411 = vpop.f32.mrb[0].mxu0
    %v412 = vadd.f32 %v99, %v411
    %v413 = vpop.f32.mrb[0].mxu0
    %v414 = vpop.f32.mrb[0].mxu0
    %v415 = vadd.f32 %v99, %v414
    %v416 = vpop.f32.mrb[0].mxu0
    %417 = vmatprep.mubr.bf16.mxu0 0
    %418 = vmatmul.mubr.bf16.gmra.mrb[0].mxu0 %v281
    %v419 = vpop.f32.mrb[0].mxu0
    %v420 = vadd.f32 %v99, %v419
    %v421 = vpop.f32.mrb[0].mxu0
    %v422 = vpop.f32.mrb[0].mxu0
    %v423 = vadd.f32 %v99, %v422
    %v424 = vpop.f32.mrb[0].mxu0
    %425 = vmatprep.mubr.bf16.mxu0 0
    %426 = vmatmul.mubr.bf16.gmra.mrb[0].mxu0 %v284
    %v427 = vpop.f32.mrb[0].mxu0
    %v428 = vadd.f32 %v99, %v427
    %v429 = vpop.f32.mrb[0].mxu0
    %v430 = vpop.f32.mrb[0].mxu0
    %v431 = vadd.f32 %v99, %v430
    %v432 = vpop.f32.mrb[0].mxu0
    %433 = vmatprep.mubr.bf16.mxu0 0
    %434 = vmatmul.mubr.bf16.gmra.mrb[0].mxu0 %v287
    %v435 = vpop.f32.mrb[0].mxu0
    %v436 = vadd.f32 %v99, %v435
    %v437 = vpop.f32.mrb[0].mxu0
    %v438 = vpop.f32.mrb[0].mxu0
    %v439 = vadd.f32 %v99, %v438
    %v440 = vpop.f32.mrb[0].mxu0
    %441 = vmatprep.mubr.bf16.mxu0 0
    %442 = vmatmul.mubr.bf16.gmra.mrb[0].mxu0 %v290
    %v443 = vpop.f32.mrb[0].mxu0
    %v444 = vadd.f32 %v99, %v443
    %v445 = vpop.f32.mrb[0].mxu0
    %v446 = vpop.f32.mrb[0].mxu0
    %v447 = vadd.f32 %v99, %v446
    %v448 = vpop.f32.mrb[0].mxu0
    %449 = vmatprep.mubr.bf16.mxu0 0
    %450 = vmatmul.mubr.bf16.gmra.mrb[0].mxu0 %v293
    %v451 = vpop.f32.mrb[0].mxu0
    %v452 = vadd.f32 %v99, %v451
    %v453 = vpop.f32.mrb[0].mxu0
    %v454 = vpop.f32.mrb[0].mxu0
    %v455 = vadd.f32 %v99, %v454
    %v456 = vpop.f32.mrb[0].mxu0
    %457 = vmatprep.mubr.bf16.mxu0 0
    %458 = vmatmul.mubr.bf16.gmra.mrb[0].mxu0 %v296
    %v459 = vpop.f32.mrb[0].mxu0
    %v460 = vadd.f32 %v99, %v459
    %v461 = vpop.f32.mrb[0].mxu0
    %v462 = vpop.f32.mrb[0].mxu0
    %v463 = vadd.f32 %v99, %v462
    %v464 = vpop.f32.mrb[0].mxu0
    %465 = vmatprep.mubr.bf16.mxu0 0
    %466 = vmatmul.mubr.bf16.gmra.mrb[0].mxu0 %v299
    %v467 = vpop.f32.mrb[0].mxu0
    %v468 = vadd.f32 %v99, %v467
    %v469 = vpop.f32.mrb[0].mxu0
    %v470 = vpop.f32.mrb[0].mxu0
    %v471 = vadd.f32 %v99, %v470
    %v472 = vpop.f32.mrb[0].mxu0
    %473 = vmatprep.mubr.bf16.mxu0 0
    %474 = vmatmul.mubr.bf16.gmra.mrb[0].mxu0 %v302
    %v475 = vpop.f32.mrb[0].mxu0
    %v476 = vadd.f32 %v99, %v475
    %v477 = vpop.f32.mrb[0].mxu0
    %v478 = vpop.f32.mrb[0].mxu0
    %v479 = vadd.f32 %v99, %v478
    %v480 = vpop.f32.mrb[0].mxu0
    %481 = vmatprep.mubr.bf16.mxu0 0
    %482 = vmatmul.mubr.bf16.gmra.mrb[0].mxu0 %v305
    %v483 = vpop.f32.mrb[0].mxu0
    %v484 = vadd.f32 %v99, %v483
    %v485 = vpop.f32.mrb[0].mxu0
    %v486 = vpop.f32.mrb[0].mxu0
    %v487 = vadd.f32 %v99, %v486
    %v488 = vpop.f32.mrb[0].mxu0
    %489 = vmatprep.mubr.bf16.mxu0 0
    %490 = vmatmul.mubr.bf16.gmra.mrb[0].mxu0 %v308
    %v491 = vpop.f32.mrb[0].mxu0
    %v492 = vadd.f32 %v99, %v491
    %v493 = vpop.f32.mrb[0].mxu0
    %v494 = vpop.f32.mrb[0].mxu0
    %v495 = vadd.f32 %v99, %v494
    %v496 = vpop.f32.mrb[0].mxu0
    %497 = vmatprep.mubr.bf16.mxu0 0
    %498 = vmatmul.mubr.bf16.gmra.mrb[0].mxu0 %v311
    %v499 = vpop.f32.mrb[0].mxu0
    %v500 = vadd.f32 %v99, %v499
    %v501 = vpop.f32.mrb[0].mxu0
    %v502 = vpop.f32.mrb[0].mxu0
    %v503 = vadd.f32 %v99, %v502
    %v504 = vpop.f32.mrb[0].mxu0
    %505 = vmatprep.mubr.bf16.mxu0 0
    %506 = vmatmul.mubr.bf16.gmra.mrb[0].mxu0 %v314
    %v507 = vpop.f32.mrb[0].mxu0
    %v508 = vadd.f32 %v99, %v507
    %v509 = vpop.f32.mrb[0].mxu0
    %v510 = vpop.f32.mrb[0].mxu0
    %v511 = vadd.f32 %v99, %v510
    %v512 = vpop.f32.mrb[0].mxu0
    %513 = vmatprep.mubr.bf16.mxu0 0
    %514 = vmatmul.mubr.bf16.gmra.mrb[0].mxu0 %v317
    %v515 = vpop.f32.mrb[0].mxu0
    %v516 = vadd.f32 %v99, %v515
    %v517 = vpop.f32.mrb[0].mxu0
    %v518 = vpop.f32.mrb[0].mxu0
    %v519 = vadd.f32 %v99, %v518
    %v520 = vpop.f32.mrb[0].mxu0
    %521 = vmatprep.mubr.bf16.mxu0 0
    %522 = vmatmul.mubr.bf16.gmra.mrb[0].mxu0 %v320
    %v523 = vpop.f32.mrb[0].mxu0
    %v524 = vadd.f32 %v99, %v523
    %v525 = vpop.f32.mrb[0].mxu0
    %v526 = vpop.f32.mrb[0].mxu0
    %v527 = vadd.f32 %v99, %v526
    %v528 = vpop.f32.mrb[0].mxu0
    %529 = vmatprep.mubr.bf16.mxu0 0
    %530 = vmatmul.mubr.bf16.gmra.mrb[0].mxu0 %v323
    %v531 = vpop.f32.mrb[0].mxu0
    %v532 = vadd.f32 %v99, %v531
    %v533 = vpop.f32.mrb[0].mxu0
    %v534 = vpop.f32.mrb[0].mxu0
    %v535 = vadd.f32 %v99, %v534
    %v536 = vpop.f32.mrb[0].mxu0
    %537 = vmatprep.mubr.bf16.mxu0 0
    %538 = vmatmul.mubr.bf16.gmra.mrb[0].mxu0 %v326
    %v539 = vpop.f32.mrb[0].mxu0
    %v540 = vadd.f32 %v99, %v539
    %v541 = vpop.f32.mrb[0].mxu0
    %v542 = vpop.f32.mrb[0].mxu0
    %v543 = vadd.f32 %v99, %v542
    %v544 = vpop.f32.mrb[0].mxu0
    %545 = vmatprep.mubr.bf16.mxu0 0
    %546 = vmatmul.mubr.bf16.gmra.mrb[0].mxu0 %v329
    %v547 = vpop.f32.mrb[0].mxu0
    %v548 = vadd.f32 %v99, %v547
    %v549 = vpop.f32.mrb[0].mxu0
    %v550 = vpop.f32.mrb[0].mxu0
    %v551 = vadd.f32 %v99, %v550
    %v552 = vpop.f32.mrb[0].mxu0
    %553 = vmatprep.mubr.bf16.mxu0 0
    %554 = vmatmul.mubr.bf16.gmra.mrb[0].mxu0 %v332
    %v555 = vpop.f32.mrb[0].mxu0
    %v556 = vadd.f32 %v99, %v555
    %v557 = vpop.f32.mrb[0].mxu0
    %v558 = vpop.f32.mrb[0].mxu0
    %v559 = vadd.f32 %v99, %v558
    %v560 = vpop.f32.mrb[0].mxu0
    %561 = vmatprep.mubr.bf16.mxu0 0
    %562 = vmatmul.mubr.bf16.gmra.mrb[0].mxu0 %v335
    %v563 = vpop.f32.mrb[0].mxu0
    %v564 = vadd.f32 %v99, %v563
    %v565 = vpop.f32.mrb[0].mxu0
    %v566 = vpop.f32.mrb[0].mxu0
    %v567 = vadd.f32 %v99, %v566
    %v568 = vpop.f32.mrb[0].mxu0
    %569 = vmatprep.mubr.bf16.mxu0 0
    %570 = vmatmul.mubr.bf16.gmra.mrb[0].mxu0 %v338
    %v571 = vpop.f32.mrb[0].mxu0
    %v572 = vadd.f32 %v99, %v571
    %v573 = vpop.f32.mrb[0].mxu0
    %v574 = vpop.f32.mrb[0].mxu0
    %v575 = vadd.f32 %v99, %v574
    %v576 = vpop.f32.mrb[0].mxu0
    %577 = vmatprep.mubr.bf16.mxu0 0
    %578 = vmatmul.mubr.bf16.gmra.mrb[0].mxu0 %v341
    %v579 = vpop.f32.mrb[0].mxu0
    %v580 = vadd.f32 %v99, %v579
    %v581 = vpop.f32.mrb[0].mxu0
    %v582 = vpop.f32.mrb[0].mxu0
    %v583 = vadd.f32 %v99, %v582
    %v584 = vpop.f32.mrb[0].mxu0
    %585 = vmatprep.mubr.bf16.mxu0 0
    %586 = vmatmul.mubr.bf16.gmra.mrb[0].mxu0 %v344
    %v587 = vpop.f32.mrb[0].mxu0
    %v588 = vadd.f32 %v99, %v587
    %v589 = vpop.f32.mrb[0].mxu0
    %v590 = vpop.f32.mrb[0].mxu0
    %v591 = vadd.f32 %v99, %v590
    %v592 = vpop.f32.mrb[0].mxu0
    %593 = vmatprep.mubr.bf16.mxu0 0
    %594 = vmatmul.mubr.bf16.gmra.mrb[0].mxu0 %v347
    %v595 = vpop.f32.mrb[0].mxu0
    %v596 = vadd.f32 %v99, %v595
    %v597 = vpop.f32.mrb[0].mxu0
    %v598 = vpop.f32.mrb[0].mxu0
    %v599 = vadd.f32 %v99, %v598
    %v600 = vpop.f32.mrb[0].mxu0
    %601 = vmatprep.mubr.bf16.mxu0 0
    %602 = vmatmul.mubr.bf16.gmra.mrb[0].mxu0 %v350
    %v603 = vpop.f32.mrb[0].mxu0
    %v604 = vadd.f32 %v99, %v603
    %v605 = vpop.f32.mrb[0].mxu0
    %v606 = vpop.f32.mrb[0].mxu0
    %v607 = vadd.f32 %v99, %v606
    %v608 = vpop.f32.mrb[0].mxu0
    %609 = vmatprep.mubr.bf16.mxu0 0
    %610 = vmatmul.mubr.bf16.gmra.mrb[0].mxu0 %v353
    %v611 = vpop.f32.mrb[0].mxu0
    %v612 = vadd.f32 %v99, %v611
    %v613 = vpop.f32.mrb[0].mxu0
    %v614 = vpop.f32.mrb[0].mxu0
    %v615 = vadd.f32 %v99, %v614
    %v616 = vpop.f32.mrb[0].mxu0
    %617 = vmatprep.mubr.bf16.mxu0 0
    %618 = vmatmul.mubr.bf16.gmra.mrb[0].mxu0 %v356
    %v619 = vpop.f32.mrb[0].mxu0
    %v620 = vadd.f32 %v99, %v619
    %v621 = vpop.f32.mrb[0].mxu0
    %v622 = vpop.f32.mrb[0].mxu0
    %v623 = vadd.f32 %v99, %v622
    %v624 = vpop.f32.mrb[0].mxu0
    %625 = vmatprep.mubr.bf16.mxu0 0
    %626 = vmatmul.mubr.bf16.gmra.mrb[0].mxu0 %v359
    %v627 = vpop.f32.mrb[0].mxu0
    %v628 = vadd.f32 %v99, %v627
    %v629 = vpop.f32.mrb[0].mxu0
    %v630 = vpop.f32.mrb[0].mxu0
    %v631 = vadd.f32 %v99, %v630
    %v632 = vpop.f32.mrb[0].mxu0
    %633 = vmatprep.mubr.bf16.mxu0 0
    %634 = vmatmul.mubr.bf16.gmra.mrb[0].mxu0 %v362
    %v635 = vpop.f32.mrb[0].mxu0
    %v636 = vadd.f32 %v99, %v635
    %v637 = vpop.f32.mrb[0].mxu0
    %v638 = vpop.f32.mrb[0].mxu0
    %v639 = vadd.f32 %v99, %v638
    %v640 = vpop.f32.mrb[0].mxu0
    %641 = vmatprep.mubr.bf16.mxu0 0
    %642 = vmatmul.mubr.bf16.gmra.mrb[0].mxu0 %v365
    %v643 = vpop.f32.mrb[0].mxu0
    %v644 = vadd.f32 %v99, %v643
    %v645 = vpop.f32.mrb[0].mxu0
    %v646 = vpop.f32.mrb[0].mxu0
    %v647 = vadd.f32 %v99, %v646
    %v648 = vpop.f32.mrb[0].mxu0
    %649 = vmatprep.mubr.bf16.mxu0 0
    %650 = vmatmul.mubr.bf16.gmra.mrb[0].mxu0 %v368
    %v651 = vpop.f32.mrb[0].mxu0
    %v652 = vadd.f32 %v99, %v651
    %v653 = vpop.f32.mrb[0].mxu0
    %v654 = vpop.f32.mrb[0].mxu0
    %v655 = vadd.f32 %v99, %v654
    %v656 = vpop.f32.mrb[0].mxu0
    %657 = vmatprep.mubr.bf16.mxu0 0
    %658 = vmatmul.mubr.bf16.gmra.mrb[0].mxu0 %v371
    %v659 = vpop.f32.mrb[0].mxu0
    %v660 = vadd.f32 %v99, %v659
    %v661 = vpop.f32.mrb[0].mxu0
    %v662 = vpop.f32.mrb[0].mxu0
    %v663 = vadd.f32 %v99, %v662
    %v664 = vpop.f32.mrb[0].mxu0
    %665 = vdwg.mxu0
    %v666 = vmax.f32 %v412, 0.0
    %v667 = vmax.f32 %v415, 0.0
    %v668 = vmax.f32 %v420, 0.0
    %v669 = vmax.f32 %v423, 0.0
    %v670 = vmax.f32 %v428, 0.0
    %v671 = vmax.f32 %v431, 0.0
    %v672 = vmax.f32 %v436, 0.0
    %v673 = vmax.f32 %v439, 0.0
    %v674 = vmax.f32 %v444, 0.0
    %v675 = vmax.f32 %v447, 0.0
    %v676 = vmax.f32 %v452, 0.0
    %v677 = vmax.f32 %v455, 0.0
    %v678 = vmax.f32 %v460, 0.0
    %v679 = vmax.f32 %v463, 0.0
    %v680 = vmax.f32 %v468, 0.0
    %v681 = vmax.f32 %v471, 0.0
    %v682 = vmax.f32 %v476, 0.0
    %v683 = vmax.f32 %v479, 0.0
    %v684 = vmax.f32 %v484, 0.0
    %v685 = vmax.f32 %v487, 0.0
    %v686 = vmax.f32 %v492, 0.0
    %v687 = vmax.f32 %v495, 0.0
    %v688 = vmax.f32 %v500, 0.0
    %v689 = vmax.f32 %v503, 0.0
    %v690 = vmax.f32 %v508, 0.0
    %v691 = vmax.f32 %v511, 0.0
    %v692 = vmax.f32 %v516, 0.0
    %v693 = vmax.f32 %v519, 0.0
    %v694 = vmax.f32 %v524, 0.0
    %v695 = vmax.f32 %v527, 0.0
    %v696 = vmax.f32 %v532, 0.0
    %v697 = vmax.f32 %v535, 0.0
    %v698 = vmax.f32 %v540, 0.0
    %v699 = vmax.f32 %v543, 0.0
    %v700 = vmax.f32 %v548, 0.0
    %v701 = vmax.f32 %v551, 0.0
    %v702 = vmax.f32 %v556, 0.0
    %v703 = vmax.f32 %v559, 0.0
    %v704 = vmax.f32 %v564, 0.0
    %v705 = vmax.f32 %v567, 0.0
    %v706 = vmax.f32 %v572, 0.0
    %v707 = vmax.f32 %v575, 0.0
    %v708 = vmax.f32 %v580, 0.0
    %v709 = vmax.f32 %v583, 0.0
    %v710 = vmax.f32 %v588, 0.0
    %v711 = vmax.f32 %v591, 0.0
    %v712 = vmax.f32 %v596, 0.0
    %v713 = vmax.f32 %v599, 0.0
    %v714 = vmax.f32 %v604, 0.0
    %v715 = vmax.f32 %v607, 0.0
    %v716 = vmax.f32 %v612, 0.0
    %v717 = vmax.f32 %v615, 0.0
    %v718 = vmax.f32 %v620, 0.0
    %v719 = vmax.f32 %v623, 0.0
    %v720 = vmax.f32 %v628, 0.0
    %v721 = vmax.f32 %v631, 0.0
    %v722 = vmax.f32 %v636, 0.0
    %v723 = vmax.f32 %v639, 0.0
    %v724 = vmax.f32 %v644, 0.0
    %v725 = vmax.f32 %v647, 0.0
    %v726 = vmax.f32 %v652, 0.0
    %v727 = vmax.f32 %v655, 0.0
    %v728 = vmax.f32 %v660, 0.0
    %v729 = vmax.f32 %v663, 0.0
    %vm730 = vcmask 261120
    %v731 = vsel %vm730, %v666, 0.0
    %v732 = vsel %vm730, %v667, 0.0
    %v733 = vadd.f32 %v731, %v732
    %v734 = vsel %vm730, %v668, 0.0
    %v735 = vadd.f32 %v733, %v734
    %v736 = vsel %vm730, %v669, 0.0
    %v737 = vadd.f32 %v735, %v736
    %v738 = vsel %vm730, %v670, 0.0
    %v739 = vadd.f32 %v737, %v738
    %v740 = vsel %vm730, %v671, 0.0
    %v741 = vadd.f32 %v739, %v740
    %v742 = vsel %vm730, %v672, 0.0
    %v743 = vadd.f32 %v741, %v742
    %v744 = vsel %vm730, %v673, 0.0
    %v745 = vadd.f32 %v743, %v744
    %v746 = vsel %vm730, %v674, 0.0
    %v747 = vadd.f32 %v745, %v746
    %v748 = vsel %vm730, %v675, 0.0
    %v749 = vadd.f32 %v747, %v748
    %v750 = vsel %vm730, %v676, 0.0
    %v751 = vadd.f32 %v749, %v750
    %v752 = vsel %vm730, %v677, 0.0
    %v753 = vadd.f32 %v751, %v752
    %v754 = vsel %vm730, %v678, 0.0
    %v755 = vadd.f32 %v753, %v754
    %v756 = vsel %vm730, %v679, 0.0
    %v757 = vadd.f32 %v755, %v756
    %v758 = vsel %vm730, %v680, 0.0
    %v759 = vadd.f32 %v757, %v758
    %v760 = vsel %vm730, %v681, 0.0
    %v761 = vadd.f32 %v759, %v760
    %v762 = vsel %vm730, %v682, 0.0
    %v763 = vadd.f32 %v761, %v762
    %v764 = vsel %vm730, %v683, 0.0
    %v765 = vadd.f32 %v763, %v764
    %v766 = vsel %vm730, %v684, 0.0
    %v767 = vadd.f32 %v765, %v766
    %v768 = vsel %vm730, %v685, 0.0
    %v769 = vadd.f32 %v767, %v768
    %v770 = vsel %vm730, %v686, 0.0
    %v771 = vadd.f32 %v769, %v770
    %v772 = vsel %vm730, %v687, 0.0
    %v773 = vadd.f32 %v771, %v772
    %v774 = vsel %vm730, %v688, 0.0
    %v775 = vadd.f32 %v773, %v774
    %v776 = vsel %vm730, %v689, 0.0
    %v777 = vadd.f32 %v775, %v776
    %v778 = vsel %vm730, %v690, 0.0
    %v779 = vadd.f32 %v777, %v778
    %v780 = vsel %vm730, %v691, 0.0
    %v781 = vadd.f32 %v779, %v780
    %v782 = vsel %vm730, %v692, 0.0
    %v783 = vadd.f32 %v781, %v782
    %v784 = vsel %vm730, %v693, 0.0
    %v785 = vadd.f32 %v783, %v784
    %v786 = vsel %vm730, %v694, 0.0
    %v787 = vadd.f32 %v785, %v786
    %v788 = vsel %vm730, %v695, 0.0
    %v789 = vadd.f32 %v787, %v788
    %v790 = vsel %vm730, %v696, 0.0
    %v791 = vadd.f32 %v789, %v790
    %v792 = vsel %vm730, %v697, 0.0
    %v793 = vadd.f32 %v791, %v792
    %v794 = vrot.slane %v793, 4
    %v795 = vadd.f32 %v793, %v794
    %v796 = vrot.slane %v795, 2
    %v797 = vadd.f32 %v795, %v796
    %v798 = vrot.slane %v797, 1
    %v799 = vadd.f32 %v797, %v798
    %v800 = vrcp.pop 256.0
    %v801 = vmul.f32 %v799, %v800
    %v802 = vsel %vm730, %v698, 0.0
    %v803 = vsel %vm730, %v699, 0.0
    %v804 = vadd.f32 %v802, %v803
    %v805 = vsel %vm730, %v700, 0.0
    %v806 = vadd.f32 %v804, %v805
    %v807 = vsel %vm730, %v701, 0.0
    %v808 = vadd.f32 %v806, %v807
    %v809 = vsel %vm730, %v702, 0.0
    %v810 = vadd.f32 %v808, %v809
    %v811 = vsel %vm730, %v703, 0.0
    %v812 = vadd.f32 %v810, %v811
    %v813 = vsel %vm730, %v704, 0.0
    %v814 = vadd.f32 %v812, %v813
    %v815 = vsel %vm730, %v705, 0.0
    %v816 = vadd.f32 %v814, %v815
    %v817 = vsel %vm730, %v706, 0.0
    %v818 = vadd.f32 %v816, %v817
    %v819 = vsel %vm730, %v707, 0.0
    %v820 = vadd.f32 %v818, %v819
    %v821 = vsel %vm730, %v708, 0.0
    %v822 = vadd.f32 %v820, %v821
    %v823 = vsel %vm730, %v709, 0.0
    %v824 = vadd.f32 %v822, %v823
    %v825 = vsel %vm730, %v710, 0.0
    %v826 = vadd.f32 %v824, %v825
    %v827 = vsel %vm730, %v711, 0.0
    %v828 = vadd.f32 %v826, %v827
    %v829 = vsel %vm730, %v712, 0.0
    %v830 = vadd.f32 %v828, %v829
    %v831 = vsel %vm730, %v713, 0.0
    %v832 = vadd.f32 %v830, %v831
    %v833 = vsel %vm730, %v714, 0.0
    %v834 = vadd.f32 %v832, %v833
    %v835 = vsel %vm730, %v715, 0.0
    %v836 = vadd.f32 %v834, %v835
    %v837 = vsel %vm730, %v716, 0.0
    %v838 = vadd.f32 %v836, %v837
    %v839 = vsel %vm730, %v717, 0.0
    %v840 = vadd.f32 %v838, %v839
    %v841 = vsel %vm730, %v718, 0.0
    %v842 = vadd.f32 %v840, %v841
    %v843 = vsel %vm730, %v719, 0.0
    %v844 = vadd.f32 %v842, %v843
    %v845 = vsel %vm730, %v720, 0.0
    %v846 = vadd.f32 %v844, %v845
    %v847 = vsel %vm730, %v721, 0.0
    %v848 = vadd.f32 %v846, %v847
    %v849 = vsel %vm730, %v722, 0.0
    %v850 = vadd.f32 %v848, %v849
    %v851 = vsel %vm730, %v723, 0.0
    %v852 = vadd.f32 %v850, %v851
    %v853 = vsel %vm730, %v724, 0.0
    %v854 = vadd.f32 %v852, %v853
    %v855 = vsel %vm730, %v725, 0.0
    %v856 = vadd.f32 %v854, %v855
    %v857 = vsel %vm730, %v726, 0.0
    %v858 = vadd.f32 %v856, %v857
    %v859 = vsel %vm730, %v727, 0.0
    %v860 = vadd.f32 %v858, %v859
    %v861 = vsel %vm730, %v728, 0.0
    %v862 = vadd.f32 %v860, %v861
    %v863 = vsel %vm730, %v729, 0.0
    %v864 = vadd.f32 %v862, %v863
    %v865 = vrot.slane %v864, 4
    %v866 = vadd.f32 %v864, %v865
    %v867 = vrot.slane %v866, 2
    %v868 = vadd.f32 %v866, %v867
    %v869 = vrot.slane %v868, 1
    %v870 = vadd.f32 %v868, %v869
    %v871 = vmul.f32 %v870, %v800
    %vm872 = vcmask 1040384
    %v873 = vsel %vm872, %v801, %v871
    %vm874 = vcmask 254976
    %875 = vst.msk [vmem:[#allocation2] sm:$0x3] %vm874, %v873
    %v876 = vld [vmem:[%s3] sm:$0xf]
    %v877 = vld [vmem:[%s3 + $0x4] sm:$0xf]
    %v878 = vld [vmem:[%s3 + $0x8] sm:$0xf]
    %v879 = vld [vmem:[%s3 + $0xc] sm:$0xf]
    %v880 = vunpack.c.l.bf16 %v876
    %v881 = vunpack.c.l.bf16 %v877
    %v882 = vunpack.c.l.bf16 %v878
    %v883 = vunpack.c.l.bf16 %v879
    %v884 = vld [vmem:[%s4] sm:$0x1]
    %v886 = vlaneseq
    %v887 = vshrl.u32 %v886, 7
    %v888 = vsub.s32 0, %v887
    %v889 = vrot.slane %v884, %v888
    %v892 = vsel %vm730, %v873, 0
    %894 = vmatprep.subr.mxu0 0.0
    %895 = vmatpush1.msra.mxu0 %v880
    %896 = vmatprep.subr.mxu0 0.0
    %897 = vmatpush1.msra.mxu0 %v881
    %898 = vmatprep.subr.mxu0 0.0
    %899 = vmatpush1.msra.mxu0 %v882
    %900 = vmatprep.subr.mxu0 0.0
    %901 = vmatpush1.msra.mxu0 %v883
    %902 = vmatprep.subr.mxu0 0.0
    %903 = vmatpush1.msra.mxu0 0.0
    %904 = vmatprep.subr.mxu0 0.0
    %905 = vmatpush1.msra.mxu0 0.0
    %906 = vmatprep.subr.mxu0 0.0
    %907 = vmatpush1.msra.mxu0 0.0
    %908 = vmatprep.subr.mxu0 0.0
    %909 = vmatpush1.msra.mxu0 0.0
    %910 = vmatprep.subr.mxu0 0.0
    %911 = vmatpush1.msra.mxu0 0.0
    %912 = vmatprep.subr.mxu0 0.0
    %913 = vmatpush1.msra.mxu0 0.0
    %914 = vmatprep.subr.mxu0 0.0
    %915 = vmatpush1.msra.mxu0 0.0
    %916 = vmatprep.subr.mxu0 0.0
    %917 = vmatpush1.msra.mxu0 0.0
    %918 = vmatprep.subr.mxu0 0.0
    %919 = vmatpush1.msra.mxu0 0.0
    %920 = vmatprep.subr.mxu0 0.0
    %921 = vmatpush1.msra.mxu0 0.0
    %922 = vmatprep.subr.mxu0 0.0
    %923 = vmatpush1.msra.mxu0 0.0
    %924 = vmatprep.subr.mxu0 0.0
    %925 = vmatpush1.msra.mxu0 0.0
    %926 = vmatprep.subr.mxu0 0.0
    %927 = vmatpush1.msra.mxu0 0.0
    %928 = vmatprep.subr.mxu0 0.0
    %929 = vmatpush1.msra.mxu0 0.0
    %930 = vmatprep.subr.mxu0 0.0
    %931 = vmatpush1.msra.mxu0 0.0
    %932 = vmatprep.subr.mxu0 0.0
    %933 = vmatpush1.msra.mxu0 0.0
    %934 = vmatprep.subr.mxu0 0.0
    %935 = vmatpush1.msra.mxu0 0.0
    %936 = vmatprep.subr.mxu0 0.0
    %937 = vmatpush1.msra.mxu0 0.0
    %938 = vmatprep.subr.mxu0 0.0
    %939 = vmatpush1.msra.mxu0 0.0
    %940 = vmatprep.subr.mxu0 0.0
    %941 = vmatpush1.msra.mxu0 0.0
    %942 = vmatprep.subr.mxu0 0.0
    %943 = vmatpush1.msra.mxu0 0.0
    %944 = vmatprep.subr.mxu0 0.0
    %945 = vmatpush1.msra.mxu0 0.0
    %946 = vmatprep.subr.mxu0 0.0
    %947 = vmatpush1.msra.mxu0 0.0
    %948 = vmatprep.subr.mxu0 0.0
    %949 = vmatpush1.msra.mxu0 0.0
    %950 = vmatprep.subr.mxu0 0.0
    %951 = vmatpush1.msra.mxu0 0.0
    %952 = vmatprep.subr.mxu0 0.0
    %953 = vmatpush1.msra.mxu0 0.0
    %954 = vmatprep.subr.mxu0 0.0
    %955 = vmatpush1.msra.mxu0 0.0
    %956 = vmatprep.subr.mxu0 0.0
    %957 = vmatpush1.msra.mxu0 0.0
    %958 = vmatprep.mubr.f32.mxu0 0.0
    %959 = vmatmul.mubr.f32.gmra.mrb[0].mxu0 %v892
    %v960 = vpop.f32.mrb[0].mxu0
    %v961 = vadd.f32 %v889, %v960
    %v962 = vpop.f32.mrb[0].mxu0
    %963 = vdwg.mxu0
    %vm964 = vcmask 58368
    %965 = vst.msk [vmem:[#allocation4] sm:$0x3] %vm964, %v961
    // Predicated region
    $region22: #{mainnet_forward.1} parent=1 // pred_check
      _
    $region23: #{mainnet_forward.1} parent=1 // pred_check_branch
      %967 = sbr.rel (0) target = $region25
    $region24: #{mainnet_forward.1} parent=1 // pred_region
      %s969 = ssub.s32 32, 32
      %970 = vsyncadd [#allocation3], %s969
      %s972 = sshll.u32 [#allocation2], 4
      %s973 = int_to_ptr.vmem [resolvable:$true] %s972
      %975 = dma.vmem_to_hbm [thread:$0]  %s973, 32, %s5, [#allocation3]
    $region25: #{mainnet_forward.1} parent=1 // pred_fallthru
      _
    // Predicated region
    $region26: #{mainnet_forward.1} parent=1 // pred_check
      _
    $region27: #{mainnet_forward.1} parent=1 // pred_check_branch
      %977 = sbr.rel (0) target = $region29
    $region28: #{mainnet_forward.1} parent=1 // pred_region
      %s979 = ssub.s32 32, 32
      %980 = vsyncadd [#allocation5], %s979
      %s982 = sshll.u32 [#allocation4], 4
      %s983 = int_to_ptr.vmem [resolvable:$true] %s982
      %985 = dma.vmem_to_hbm [thread:$0]  %s983, 32, %s6, [#allocation5]
    $region29: #{mainnet_forward.1} parent=1 // pred_fallthru
      _
    // Predicated region
    $region30: #{mainnet_forward.1} parent=1 // pred_check
      _
    $region31: #{mainnet_forward.1} parent=1 // pred_check_branch
      %987 = sbr.rel (0) target = $region33
    $region32: #{mainnet_forward.1} parent=1 // pred_region
      %988 = dma.done [#allocation3], 32
    $region33: #{mainnet_forward.1} parent=1 // pred_fallthru
      _
    // Predicated region
    $region34: #{mainnet_forward.1} parent=1 // pred_check
      _
    $region35: #{mainnet_forward.1} parent=1 // pred_check_branch
      %990 = sbr.rel (0) target = $region37
    $region36: #{mainnet_forward.1} parent=1 // pred_region
      %991 = dma.done [#allocation5], 32
    $region37: #{mainnet_forward.1} parent=1 // pred_fallthru
      _
    %992 = vsyncpa [#allocation3], 1
    %993 = vsyncpa [#allocation5], 1

</llo_original>
